<compile_context>
chip_gen: v6e
topology: v6e:2x2x1
jax: 0.10.0
libtpu: 0.0.40
codegen_flags: <defaults>
</compile_context>

<pallas_src>
import functools

import jax
import jax.numpy as jnp
from jax import lax
from jax.experimental import pallas as pl
from jax.experimental.pallas import tpu as pltpu


# ---------------------------------------------------------------------------
# Kernel body
# ---------------------------------------------------------------------------
def _mean_encoder_kernel(x_ref, w_ref, b_ref, o_ref, acc_ref, *, inv_s):
    # x_ref: (tb, ts, DinF)  w_ref: (DinF, DoutP)  b_ref: (1, DoutP)
    # o_ref: (tb, DoutP)     acc_ref: (tb, DinF) f32 scratch (persists over S)
    s = pl.program_id(1)

    @pl.when(s == 0)
    def _init():
        acc_ref[...] = jnp.zeros_like(acc_ref)

    # Hot path: stream x in its native dtype, accumulate the sequence sum in
    # f32.  Lane folding makes the (ts, DinF) tiles lane-dense, so the per-tile
    # sublane reduce stays hidden under the HBM DMA (kernel is HBM-bound).
    acc_ref[...] += jnp.sum(x_ref[...], axis=1, dtype=jnp.float32)

    @pl.when(s == pl.num_programs(1) - 1)
    def _epilogue():
        mean = acc_ref[...] * inv_s                       # (tb, DinF), 1/S folded here
        w = w_ref[...]
        # Native MXU path: keep bf16 weights in bf16 (f32 accumulate); only run
        # an f32 x f32 matmul when the weights really are f32.
        lhs = mean if w.dtype == jnp.float32 else mean.astype(w.dtype)
        y = lax.dot_general(lhs, w,
                            dimension_numbers=(((1,), (0,)), ((), ())),
                            preferred_element_type=jnp.float32)
        y = y + b_ref[...].astype(jnp.float32)            # (1, DoutP) broadcast
        o_ref[...] = jnp.maximum(y, 0.0).astype(o_ref.dtype)


# ---------------------------------------------------------------------------
# Tiling / VMEM planning helpers
# ---------------------------------------------------------------------------
def _round_up(n, m):
    return ((n + m - 1) // m) * m


def _fold_factor(seq_len, din):
    """Consecutive sequence steps folded into the lane dim so the folded
    feature width approaches a full 128-lane vreg (only when Din < 128)."""
    if din >= 128:
        return 1
    k_max = max(1, 128 // din)
    for k in range(k_max, 0, -1):
        if seq_len % k == 0:
            return k
    return 1


def _pick_tb(batch, cap):
    """Largest multiple-of-8 divisor of `batch` <= cap; falls back to the full
    batch (a full-extent block is always layout-legal)."""
    cap = max(1, min(batch, cap))
    d = (cap // 8) * 8
    while d >= 8:
        if batch % d == 0:
            return d
        d -= 8
    return batch


def _pick_ts(n, cap, mult):
    """Divisor of n <= cap that is a multiple of `mult`, or n itself when the
    whole extent fits the cap (full-extent blocks are always legal).
    Returns 0 if no legal choice exists (caller pads) -- never exceeds cap."""
    cap = max(1, min(n, cap))
    if n <= cap:
        return n
    d = (cap // mult) * mult
    while d >= mult:
        if n % d == 0:
            return d
        d -= mult
    return 0


def _vmem_plan():
    """(vmem_limit_bytes or None, per-x-buffer byte cap, two_tensorcores)."""
    try:
        kind = jax.devices()[0].device_kind.lower()
    except Exception:
        kind = ""
    if "v5" in kind or "v6" in kind:
        return 96 << 20, 14 << 20, False      # 128 MiB physical VMEM, 1 TC
    if "7" in kind:
        return 44 << 20, 10 << 20, True       # v7x: 64 MiB physical per TC, 2 TCs
    return None, 3 << 20, False               # unknown chip: keep default scoped limit


def _select_tiles(batch, seq_f, din_f, dout_p, *, x_itemsize, w_itemsize,
                  out_itemsize, acct_limit, xbuf_cap, two_core):
    """Jointly pick (tb, ts) against the VMEM budget.
    Returns (tb, ts, pad_to) where pad_to (if not None) is the padded folded
    sequence length required so ts tiles exactly."""
    sub = {4: 8, 2: 16, 1: 32}.get(x_itemsize, 8)   # dtype-aware sublane multiple

    tb_cap = 256
    if two_core and batch >= 16:
        tb_cap = min(tb_cap, batch // 2)     # keep >= 2 batch tiles so both TCs work
    tb = _pick_tb(batch, tb_cap)

    # Grid-invariant weight + bias budgeted at 2 buffers (the Buffered(1)
    # request is treated as a bonus), plus headroom for internal scratch.
    fixed = 2 * (din_f * dout_p + dout_p) * w_itemsize + (2 << 20)

    while True:
        per_tb = 2 * tb * dout_p * out_itemsize + tb * din_f * 4   # out dbl-buf + f32 acc
        avail = acct_limit - fixed - per_tb
        xbuf = min(xbuf_cap, max(avail // 2, tb * din_f * x_itemsize))
        ts_cap = max(1, xbuf // (tb * din_f * x_itemsize))
        if ts_cap >= sub or tb <= 8:
            break
        new_tb = _pick_tb(batch, max(8, tb // 2))   # large Din: shrink tb, grow ts
        if new_tb >= tb:
            break
        tb = new_tb

    ts = _pick_ts(seq_f, ts_cap, sub)
    pad_to = None
    if ts == 0:
        # No aligned divisor fits the budget: pad the folded sequence with zero
        # rows (they add nothing to the sum) instead of silently blowing VMEM
        # with a full-extent block.
        ts = max(sub, (min(ts_cap, seq_f) // sub) * sub)
        pad_to = _round_up(seq_f, ts)
    return tb, ts, pad_to


# ---------------------------------------------------------------------------
# Wrapper
# ---------------------------------------------------------------------------
def prepare_mean_encoder_params(w, b, seq_len):
    """One-time layout prep for static weights (hoisted out of the per-call
    path): transpose, k-fold row-tile, pad Dout to a lane-dense multiple of
    128.  Returns (w_fold, b_pad, fold, dout)."""
    dout, din = w.shape
    fold = _fold_factor(seq_len, din)
    dout_p = max(128, _round_up(dout, 128))
    w_fold = jnp.zeros((fold * din, dout_p), w.dtype).at[:, :dout].set(
        jnp.tile(w.T, (fold, 1)))
    b_pad = jnp.zeros((1, dout_p), b.dtype).at[0, :dout].set(b)
    return w_fold, b_pad, fold, dout


def mean_encoder_apply(x, w_fold, b_pad, fold, dout):
    """x: (B, S, Din) -> relu(mean(x, 1) @ W.T + b): (B, dout)."""
    B, S, Din = x.shape
    assert S % fold == 0
    inv_s = 1.0 / float(S)
    din_f = fold * Din
    dout_p = w_fold.shape[1]

    x_f = x.reshape(B, S // fold, din_f)      # contiguous reshape: free (no copy)
    seq_f = S // fold

    limit_bytes, xbuf_cap, two_core = _vmem_plan()
    acct_limit = limit_bytes if limit_bytes is not None else (16 << 20)

    tb, ts, pad_to = _select_tiles(
        B, seq_f, din_f, dout_p,
        x_itemsize=x.dtype.itemsize,
        w_itemsize=w_fold.dtype.itemsize,
        out_itemsize=x.dtype.itemsize,
        acct_limit=acct_limit, xbuf_cap=xbuf_cap, two_core=two_core)

    if pad_to is not None and pad_to != seq_f:
        x_f = jnp.pad(x_f, ((0, 0), (0, pad_to - seq_f), (0, 0)))
        seq_f = pad_to

    grid = (B // tb, seq_f // ts)
    kernel = functools.partial(_mean_encoder_kernel, inv_s=inv_s)

    cp_kwargs = dict(dimension_semantics=("parallel", "arbitrary"))
    # TODO(synk): switch the batch axis to pltpu.CORE_PARALLEL on v7x if plain
    # "parallel" does not shard this grid axis across both TensorCores.
    if limit_bytes is not None:
        cp_kwargs["vmem_limit_bytes"] = int(limit_bytes)
    compiler_params = pltpu.CompilerParams(**cp_kwargs)

    def _call(single_buffer_invariants):
        extra = ({"pipeline_mode": pl.Buffered(1)}
                 if single_buffer_invariants else {})
        grid_spec = pltpu.PrefetchScalarGridSpec(
            num_scalar_prefetch=0,
            grid=grid,
            in_specs=[
                pl.BlockSpec((tb, ts, din_f), lambda i, s: (i, s, 0)),
                pl.BlockSpec((din_f, dout_p), lambda i, s: (0, 0), **extra),
                pl.BlockSpec((1, dout_p), lambda i, s: (0, 0), **extra),
            ],
            out_specs=pl.BlockSpec((tb, dout_p), lambda i, s: (i, 0)),
            scratch_shapes=[pltpu.VMEM((tb, din_f), jnp.float32)],
        )
        out = pl.pallas_call(
            kernel,
            out_shape=jax.ShapeDtypeStruct((B, dout_p), x.dtype),
            grid_spec=grid_spec,
            compiler_params=compiler_params,
        )(x_f, w_fold, b_pad)
        return jax.block_until_ready(out)

    try:
        # Grid-invariant weight / bias: single-buffer them to halve their VMEM
        # footprint (most valuable on v7x's 64 MiB VMEM / for large Din).
        out_p = _call(True)
    except Exception:
        out_p = _call(False)   # older jax without pipeline_mode / Buffered(1)

    return out_p[:, :dout]


def mean_encoder(x, w, b):
    """Convenience wrapper: relu(mean(x, dim=1) @ w.T + b)."""
    params = prepare_mean_encoder_params(w, b, seq_len=x.shape[1])
    return mean_encoder_apply(x, *params)


if __name__ == "__main__":
    # Small shapes consistent with the module's forward:
    # batch=2, seq=8, input_size=32, output_size=32
    B, S, Din, Dout = 2, 8, 32, 32

    key = jax.random.PRNGKey(0)
    kx, kw, kb = jax.random.split(key, 3)

    x = jax.random.normal(kx, (B, S, Din), dtype=jnp.float32)
    bound = 1.0 / (Din ** 0.5)
    w = jax.random.uniform(kw, (Dout, Din), minval=-bound, maxval=bound,
                           dtype=jnp.float32)
    b = jax.random.uniform(kb, (Dout,), minval=-bound, maxval=bound,
                           dtype=jnp.float32)

    # Static weights: hoist the layout prep out of the per-call path.
    params = prepare_mean_encoder_params(w, b, seq_len=S)
    out = mean_encoder_apply(x, *params)
    out = jax.block_until_ready(out)

    # Pure-JAX reference check of the forward semantics.
    ref = jnp.maximum(jnp.mean(x, axis=1) @ w.T + b, 0.0)
    assert out.shape == (B, Dout)
    assert jnp.allclose(out, ref, atol=1e-5, rtol=1e-5), \
        float(jnp.max(jnp.abs(out - ref)))

    print("KERNEL_OK")
</pallas_src>

<mosaic_0001>
module attributes {stable_mosaic.version = 11 : i64} {
  func.func @_mean_encoder_kernel(%arg0: i32, %arg1: i32, %arg2: memref<2x2x128xf32, #tpu.memory_space<vmem>>, %arg3: memref<128x128xf32, #tpu.memory_space<vmem>>, %arg4: memref<1x128xf32, #tpu.memory_space<vmem>>, %arg5: memref<2x128xf32, #tpu.memory_space<vmem>>, %arg6: memref<2x128xf32, #tpu.memory_space<vmem>>) attributes {dimension_semantics = [#tpu.dimension_semantics<parallel>, #tpu.dimension_semantics<arbitrary>], iteration_bounds = array<i64: 1, 1>, scalar_prefetch = 0 : i64, scratch_operands = 1 : i64, tpu.core_type = #tpu.core_type<tc>, window_params = [{transform_indices = @transform_0, window_bounds = array<i64: 2, 2, 128>}, {pipeline_mode = #tpu.pipeline_mode<synchronous>, transform_indices = @transform_1, window_bounds = array<i64: 128, 128>}, {pipeline_mode = #tpu.pipeline_mode<synchronous>, transform_indices = @transform_2, window_bounds = array<i64: 1, 128>}, {transform_indices = @transform_3, window_bounds = array<i64: 2, 128>}]} {
    %c0_i32 = arith.constant 0 : i32
    %0 = arith.cmpi eq, %arg1, %c0_i32 : i32
    %1 = arith.extui %0 : i1 to i32
    %c0_i32_0 = arith.constant 0 : i32
    %2 = arith.cmpi ne, %1, %c0_i32_0 : i32
    scf.if %2 {
      %cst_9 = arith.constant 0.000000e+00 : f32
      %11 = vector.broadcast %cst_9 : f32 to vector<2x128xf32>
      %c0_10 = arith.constant 0 : index
      %c0_11 = arith.constant 0 : index
      %12 = vector.load %arg6[%c0_10, %c0_11] : memref<2x128xf32, #tpu.memory_space<vmem>>, vector<2x128xf32>
      tpu.vector_store %arg6[%c0_10, %c0_11], %11 {strides = array<i32>} : memref<2x128xf32, #tpu.memory_space<vmem>>, vector<2x128xf32>,
    } else {
    }
    %c0 = arith.constant 0 : index
    %c0_1 = arith.constant 0 : index
    %3 = vector.load %arg6[%c0, %c0_1] : memref<2x128xf32, #tpu.memory_space<vmem>>, vector<2x128xf32>
    %c0_2 = arith.constant 0 : index
    %c0_3 = arith.constant 0 : index
    %c0_4 = arith.constant 0 : index
    %4 = vector.load %arg2[%c0_2, %c0_3, %c0_4] : memref<2x2x128xf32, #tpu.memory_space<vmem>>, vector<2x2x128xf32>
    %cst = arith.constant dense<0.000000e+00> : vector<2x128xf32>
    %5 = vector.multi_reduction <add>, %4, %cst [1] : vector<2x2x128xf32> to vector<2x128xf32>
    %6 = arith.addf %3, %5 : vector<2x128xf32>
    %c0_5 = arith.constant 0 : index
    %c0_6 = arith.constant 0 : index
    %7 = vector.load %arg6[%c0_5, %c0_6] : memref<2x128xf32, #tpu.memory_space<vmem>>, vector<2x128xf32>
    tpu.vector_store %arg6[%c0_5, %c0_6], %6 {strides = array<i32>} : memref<2x128xf32, #tpu.memory_space<vmem>>, vector<2x128xf32>,
    %c0_i32_7 = arith.constant 0 : i32
    %8 = arith.cmpi eq, %arg1, %c0_i32_7 : i32
    %9 = arith.extui %8 : i1 to i32
    %c0_i32_8 = arith.constant 0 : i32
    %10 = arith.cmpi ne, %9, %c0_i32_8 : i32
    scf.if %10 {
      %c0_9 = arith.constant 0 : index
      %c0_10 = arith.constant 0 : index
      %11 = vector.load %arg6[%c0_9, %c0_10] : memref<2x128xf32, #tpu.memory_space<vmem>>, vector<2x128xf32>
      %cst_11 = arith.constant 1.250000e-01 : f32
      %12 = vector.broadcast %cst_11 : f32 to vector<2x128xf32>
      %13 = arith.mulf %11, %12 : vector<2x128xf32>
      %c0_12 = arith.constant 0 : index
      %c0_13 = arith.constant 0 : index
      %14 = vector.load %arg3[%c0_12, %c0_13] : memref<128x128xf32, #tpu.memory_space<vmem>>, vector<128x128xf32>
      %cst_14 = arith.constant dense<0.000000e+00> : vector<2x128xf32>
      %15 = tpu.matmul %13, %14, %cst_14 {dimension_numbers = #tpu.dot_dimension_numbers<[1], [0], [0], [1], [0, 0, 1, 1], [], []>} : vector<2x128xf32>, vector<128x128xf32>, vector<2x128xf32> -> vector<2x128xf32>
      %c0_15 = arith.constant 0 : index
      %c0_16 = arith.constant 0 : index
      %16 = vector.load %arg4[%c0_15, %c0_16] : memref<1x128xf32, #tpu.memory_space<vmem>>, vector<1x128xf32>
      %17 = vector.broadcast %16 : vector<1x128xf32> to vector<2x128xf32>
      %18 = arith.addf %15, %17 : vector<2x128xf32>
      %cst_17 = arith.constant 0.000000e+00 : f32
      %19 = vector.broadcast %cst_17 : f32 to vector<2x128xf32>
      %20 = arith.maximumf %18, %19 : vector<2x128xf32>
      %c0_18 = arith.constant 0 : index
      %c0_19 = arith.constant 0 : index
      %21 = vector.load %arg5[%c0_18, %c0_19] : memref<2x128xf32, #tpu.memory_space<vmem>>, vector<2x128xf32>
      tpu.vector_store %arg5[%c0_18, %c0_19], %20 {strides = array<i32>} : memref<2x128xf32, #tpu.memory_space<vmem>>, vector<2x128xf32>,
    } else {
    }
    return
  }
  func.func @transform_0(%arg0: i32, %arg1: i32) -> (i32, i32, i32) {
    %c0_i32 = arith.constant 0 : i32
    %c0_i32_0 = arith.constant 0 : i32
    return %arg0, %arg1, %c0_i32 : i32, i32, i32
  }
  func.func @transform_1(%arg0: i32, %arg1: i32) -> (i32, i32) {
    %c0_i32 = arith.constant 0 : i32
    %c0_i32_0 = arith.constant 0 : i32
    %c0_i32_1 = arith.constant 0 : i32
    return %c0_i32, %c0_i32_0 : i32, i32
  }
  func.func @transform_2(%arg0: i32, %arg1: i32) -> (i32, i32) {
    %c0_i32 = arith.constant 0 : i32
    %c0_i32_0 = arith.constant 0 : i32
    %c0_i32_1 = arith.constant 0 : i32
    return %c0_i32, %c0_i32_0 : i32, i32
  }
  func.func @transform_3(%arg0: i32, %arg1: i32) -> (i32, i32) {
    %c0_i32 = arith.constant 0 : i32
    %c0_i32_0 = arith.constant 0 : i32
    return %arg0, %c0_i32 : i32, i32
  }
}

module attributes {stable_mosaic.version = 11 : i64} {
  func.func @_mean_encoder_kernel(%arg0: i32, %arg1: i32, %arg2: memref<2x2x128xf32, #tpu.memory_space<vmem>>, %arg3: memref<128x128xf32, #tpu.memory_space<vmem>>, %arg4: memref<1x128xf32, #tpu.memory_space<vmem>>, %arg5: memref<2x128xf32, #tpu.memory_space<vmem>>, %arg6: memref<2x128xf32, #tpu.memory_space<vmem>>) attributes {dimension_semantics = [#tpu.dimension_semantics<parallel>, #tpu.dimension_semantics<arbitrary>], iteration_bounds = array<i64: 1, 1>, scalar_prefetch = 0 : i64, scratch_operands = 1 : i64, tpu.core_type = #tpu.core_type<tc>, window_params = [{transform_indices = @transform_0, window_bounds = array<i64: 2, 2, 128>}, {pipeline_mode = #tpu.pipeline_mode<synchronous>, transform_indices = @transform_1, window_bounds = array<i64: 128, 128>}, {pipeline_mode = #tpu.pipeline_mode<synchronous>, transform_indices = @transform_2, window_bounds = array<i64: 1, 128>}, {transform_indices = @transform_3, window_bounds = array<i64: 2, 128>}]} {
    %c0_i32 = arith.constant 0 : i32
    %0 = arith.cmpi eq, %arg1, %c0_i32 : i32
    %1 = arith.extui %0 : i1 to i32
    %c0_i32_0 = arith.constant 0 : i32
    %2 = arith.cmpi ne, %1, %c0_i32_0 : i32
    scf.if %2 {
      %cst_9 = arith.constant 0.000000e+00 : f32
      %11 = vector.broadcast %cst_9 : f32 to vector<2x128xf32>
      %c0_10 = arith.constant 0 : index
      %c0_11 = arith.constant 0 : index
      %12 = vector.load %arg6[%c0_10, %c0_11] : memref<2x128xf32, #tpu.memory_space<vmem>>, vector<2x128xf32>
      tpu.vector_store %arg6[%c0_10, %c0_11], %11 {strides = array<i32>} : memref<2x128xf32, #tpu.memory_space<vmem>>, vector<2x128xf32>,
    } else {
    }
    %c0 = arith.constant 0 : index
    %c0_1 = arith.constant 0 : index
    %3 = vector.load %arg6[%c0, %c0_1] : memref<2x128xf32, #tpu.memory_space<vmem>>, vector<2x128xf32>
    %c0_2 = arith.constant 0 : index
    %c0_3 = arith.constant 0 : index
    %c0_4 = arith.constant 0 : index
    %4 = vector.load %arg2[%c0_2, %c0_3, %c0_4] : memref<2x2x128xf32, #tpu.memory_space<vmem>>, vector<2x2x128xf32>
    %cst = arith.constant dense<0.000000e+00> : vector<2x128xf32>
    %5 = vector.multi_reduction <add>, %4, %cst [1] : vector<2x2x128xf32> to vector<2x128xf32>
    %6 = arith.addf %3, %5 : vector<2x128xf32>
    %c0_5 = arith.constant 0 : index
    %c0_6 = arith.constant 0 : index
    %7 = vector.load %arg6[%c0_5, %c0_6] : memref<2x128xf32, #tpu.memory_space<vmem>>, vector<2x128xf32>
    tpu.vector_store %arg6[%c0_5, %c0_6], %6 {strides = array<i32>} : memref<2x128xf32, #tpu.memory_space<vmem>>, vector<2x128xf32>,
    %c0_i32_7 = arith.constant 0 : i32
    %8 = arith.cmpi eq, %arg1, %c0_i32_7 : i32
    %9 = arith.extui %8 : i1 to i32
    %c0_i32_8 = arith.constant 0 : i32
    %10 = arith.cmpi ne, %9, %c0_i32_8 : i32
    scf.if %10 {
      %c0_9 = arith.constant 0 : index
      %c0_10 = arith.constant 0 : index
      %11 = vector.load %arg6[%c0_9, %c0_10] : memref<2x128xf32, #tpu.memory_space<vmem>>, vector<2x128xf32>
      %cst_11 = arith.constant 1.250000e-01 : f32
      %12 = vector.broadcast %cst_11 : f32 to vector<2x128xf32>
      %13 = arith.mulf %11, %12 : vector<2x128xf32>
      %c0_12 = arith.constant 0 : index
      %c0_13 = arith.constant 0 : index
      %14 = vector.load %arg3[%c0_12, %c0_13] : memref<128x128xf32, #tpu.memory_space<vmem>>, vector<128x128xf32>
      %cst_14 = arith.constant dense<0.000000e+00> : vector<2x128xf32>
      %15 = tpu.matmul %13, %14, %cst_14 {dimension_numbers = #tpu.dot_dimension_numbers<[1], [0], [0], [1], [0, 0, 1, 1], [], []>} : vector<2x128xf32>, vector<128x128xf32>, vector<2x128xf32> -> vector<2x128xf32>
      %c0_15 = arith.constant 0 : index
      %c0_16 = arith.constant 0 : index
      %16 = vector.load %arg4[%c0_15, %c0_16] : memref<1x128xf32, #tpu.memory_space<vmem>>, vector<1x128xf32>
      %17 = vector.broadcast %16 : vector<1x128xf32> to vector<2x128xf32>
      %18 = arith.addf %15, %17 : vector<2x128xf32>
      %cst_17 = arith.constant 0.000000e+00 : f32
      %19 = vector.broadcast %cst_17 : f32 to vector<2x128xf32>
      %20 = arith.maximumf %18, %19 : vector<2x128xf32>
      %c0_18 = arith.constant 0 : index
      %c0_19 = arith.constant 0 : index
      %21 = vector.load %arg5[%c0_18, %c0_19] : memref<2x128xf32, #tpu.memory_space<vmem>>, vector<2x128xf32>
      tpu.vector_store %arg5[%c0_18, %c0_19], %20 {strides = array<i32>} : memref<2x128xf32, #tpu.memory_space<vmem>>, vector<2x128xf32>,
    } else {
    }
    return
  }
  func.func @transform_0(%arg0: i32, %arg1: i32) -> (i32, i32, i32) {
    %c0_i32 = arith.constant 0 : i32
    %c0_i32_0 = arith.constant 0 : i32
    return %arg0, %arg1, %c0_i32 : i32, i32, i32
  }
  func.func @transform_1(%arg0: i32, %arg1: i32) -> (i32, i32) {
    %c0_i32 = arith.constant 0 : i32
    %c0_i32_0 = arith.constant 0 : i32
    %c0_i32_1 = arith.constant 0 : i32
    return %c0_i32, %c0_i32_0 : i32, i32
  }
  func.func @transform_2(%arg0: i32, %arg1: i32) -> (i32, i32) {
    %c0_i32 = arith.constant 0 : i32
    %c0_i32_0 = arith.constant 0 : i32
    %c0_i32_1 = arith.constant 0 : i32
    return %c0_i32, %c0_i32_0 : i32, i32
  }
  func.func @transform_3(%arg0: i32, %arg1: i32) -> (i32, i32) {
    %c0_i32 = arith.constant 0 : i32
    %c0_i32_0 = arith.constant 0 : i32
    return %arg0, %c0_i32 : i32, i32
  }
}

</mosaic_0001>

<llo_original>
// kernel: tpu_custom_call.1
$region0: #{tpu_custom_call.1}
  #allocation0 [shape = 'u32[]', space=smem, size = 0x4, offset = 0x4, fixed_abs, tag = 'smem constant byte address 0x4 - core index']
  #allocation1 [shape = 'u32[144,128]{1,0:T(1,128)}', space=vmem, size = 0x12000, scoped, tag = 'internal scratch']
  #allocation2 [shape = 'f32[2,128]{1,0:T(2,128)}', space=vmem, size = 0x400, scoped, tag = 'scratch operand']
  %s0 = inlined_call_operand.hbm [shape: f32[2,2,128], index: 0, kind: input, shape index: {}]
  %s1 = inlined_call_operand.hbm [shape: f32[128,128], index: 1, kind: input, shape index: {}]
  %s2 = inlined_call_operand.vmem [shape: f32[1,128], index: 2, kind: input, shape index: {}]
  %s3 = inlined_call_operand.hbm [shape: f32[2,128], index: 3, kind: output, shape index: {}]
  %s4 = sld [smem:[#allocation0]]
  $region38: #{tpu_custom_call.1} parent=0
    _
  %s6 = ssub.s32 1, %s4
  %s7 = scalar_select 0, %s6, %s4
  $region1: #{tpu_custom_call.1} parent=0
    #allocation3 [shape = 'u8[2048]{0}', space=vmem, size = 0x800, scoped, tag = 'input window, operand 0, single buffered']
    #allocation4 [shape = 's32[1]{0}', space=sflag, size = 0x4, scoped, tag = 'scoped memory for tpu_custom_call.1']
    #allocation5 [shape = 's32[1]{0}', space=sflag, size = 0x4, scoped, tag = 'scoped memory for tpu_custom_call.1']
    #allocation6 [shape = 'u8[65536]{0}', space=vmem, size = 0x10000, scoped, tag = 'input window, operand 1, single buffered']
    #allocation7 [shape = 's32[1]{0}', space=sflag, size = 0x4, scoped, tag = 'scoped memory for tpu_custom_call.1']
    #allocation8 [shape = 'u8[1024]{0}', space=vmem, size = 0x400, scoped, tag = 'output window, operand 0, single buffered']
    %8 = vsyncpa [#allocation4], 0
    %9 = vsyncpa [#allocation7], 0
    %10 = vsyncpa [#allocation5], 0
    // Predicated region
    $region2: #{tpu_custom_call.1} parent=1 // pred_check
      _
    $region3: #{tpu_custom_call.1} parent=1 // pred_check_branch
      %12 = sbr.rel (0) target = $region5
    $region4: #{tpu_custom_call.1} parent=1 // pred_region
      %s14 = ssub.s32 64, 64
      %15 = vsyncadd [#allocation4], %s14
      %s16 = sshll.u32 [#allocation3], 4
      %s17 = int_to_ptr.vmem [resolvable:$true] %s16
      %22 = dma.hbm_to_vmem [thread:$0]  %s0, 64, %s17, [#allocation4], 32, 32, 2
    $region5: #{tpu_custom_call.1} parent=1 // pred_fallthru
      _
    // Predicated region
    $region6: #{tpu_custom_call.1} parent=1 // pred_check
      _
    $region7: #{tpu_custom_call.1} parent=1 // pred_check_branch
      %24 = sbr.rel (0) target = $region9
    $region8: #{tpu_custom_call.1} parent=1 // pred_region
      %s26 = ssub.s32 2048, 2048
      %27 = vsyncadd [#allocation7], %s26
      %s28 = sshll.u32 [#allocation6], 4
      %s29 = int_to_ptr.vmem [resolvable:$true] %s28
      %34 = dma.hbm_to_vmem [thread:$0]  %s1, 2048, %s29, [#allocation7], 128, 128, 8
    $region9: #{tpu_custom_call.1} parent=1 // pred_fallthru
      _
    // Predicated region
    $region10: #{tpu_custom_call.1} parent=1 // pred_check
      _
    $region11: #{tpu_custom_call.1} parent=1 // pred_check_branch
      %36 = sbr.rel (0) target = $region13
    $region12: #{tpu_custom_call.1} parent=1 // pred_region
      _
    $region13: #{tpu_custom_call.1} parent=1 // pred_fallthru
      _
    // Predicated region
    $region14: #{tpu_custom_call.1} parent=1 // pred_check
      _
    $region15: #{tpu_custom_call.1} parent=1 // pred_check_branch
      %38 = sbr.rel (0) target = $region17
    $region16: #{tpu_custom_call.1} parent=1 // pred_region
      %39 = dma.done [#allocation4], 64
    $region17: #{tpu_custom_call.1} parent=1 // pred_fallthru
      _
    // Predicated region
    $region18: #{tpu_custom_call.1} parent=1 // pred_check
      _
    $region19: #{tpu_custom_call.1} parent=1 // pred_check_branch
      %41 = sbr.rel (0) target = $region21
    $region20: #{tpu_custom_call.1} parent=1 // pred_region
      %42 = dma.done [#allocation7], 2048
    $region21: #{tpu_custom_call.1} parent=1 // pred_fallthru
      _
    %p43 = scmp.eq.s32.totalorder 0, 0
    // Predicated region
    $region22: #{tpu_custom_call.1} parent=1 // pred_check
      %p44 = pneg %p43
    $region23: #{tpu_custom_call.1} parent=1 // pred_check_branch
      %46 = sbr.rel (%p44) target = $region25
    $region24: #{tpu_custom_call.1} parent=1 // pred_region
      %47 = vst [vmem:[#allocation2] sm:$0x3] 0.0
    $region25: #{tpu_custom_call.1} parent=1 // pred_fallthru
      _
    %v48 = vld [vmem:[#allocation2] sm:$0x3]
    %v49 = vld [vmem:[#allocation3] sm:$0x3]
    %v50 = vld [vmem:[#allocation3 + $0x2] sm:$0x3]
    %vm51 = vcmask 1041408
    %v52 = vsel %vm51, %v49, 0.0
    %v53 = vrot.slane %v52, 4
    %v54 = vadd.f32 %v52, %v53
    %v55 = vrot.slane %v54, 2
    %v56 = vadd.f32 %v54, %v55
    %v57 = vrot.slane %v56, 1
    %v58 = vadd.f32 %v56, %v57
    %v59 = vsel %vm51, %v50, 0.0
    %v60 = vrot.slane %v59, 4
    %v61 = vadd.f32 %v59, %v60
    %v62 = vrot.slane %v61, 2
    %v63 = vadd.f32 %v61, %v62
    %v64 = vrot.slane %v63, 1
    %v65 = vadd.f32 %v63, %v64
    %vm68 = vcmask 1041409
    %v69 = vsel %vm68, %v65, %v58
    %v71 = vadd.f32 %v48, %v69
    %72 = vst [vmem:[#allocation2] sm:$0x3] %v71
    // Predicated region
    $region26: #{tpu_custom_call.1} parent=1 // pred_check
      %p73 = pneg %p43
    $region27: #{tpu_custom_call.1} parent=1 // pred_check_branch
      %75 = sbr.rel (%p73) target = $region29
    $region28: #{tpu_custom_call.1} parent=1 // pred_region
      %v76 = vld [vmem:[#allocation2] sm:$0x3]
      %v77 = vmul.f32 %v76, 0.125
      %v78 = vld [vmem:[#allocation6] sm:$0xff]
      %v79 = vld [vmem:[#allocation6 + $0x8] sm:$0xff]
      %v80 = vld [vmem:[#allocation6 + $0x10] sm:$0xff]
      %v81 = vld [vmem:[#allocation6 + $0x18] sm:$0xff]
      %v82 = vld [vmem:[#allocation6 + $0x20] sm:$0xff]
      %v83 = vld [vmem:[#allocation6 + $0x28] sm:$0xff]
      %v84 = vld [vmem:[#allocation6 + $0x30] sm:$0xff]
      %v85 = vld [vmem:[#allocation6 + $0x38] sm:$0xff]
      %v86 = vld [vmem:[#allocation6 + $0x40] sm:$0xff]
      %v87 = vld [vmem:[#allocation6 + $0x48] sm:$0xff]
      %v88 = vld [vmem:[#allocation6 + $0x50] sm:$0xff]
      %v89 = vld [vmem:[#allocation6 + $0x58] sm:$0xff]
      %v90 = vld [vmem:[#allocation6 + $0x60] sm:$0xff]
      %v91 = vld [vmem:[#allocation6 + $0x68] sm:$0xff]
      %v92 = vld [vmem:[#allocation6 + $0x70] sm:$0xff]
      %v93 = vld [vmem:[#allocation6 + $0x78] sm:$0xff]
      %v94 = vld [vmem:[%s2] sm:$0x1]
      %v96 = vlaneseq
      %v97 = vshrl.u32 %v96, 7
      %v98 = vsub.s32 0, %v97
      %v99 = vrot.slane %v94, %v98
      %101 = vmatprep.subr.mxu0 0.0
      %102 = vmatpush1.msra.mxu0 %v93
      %103 = vmatprep.subr.mxu0 0.0
      %104 = vmatpush1.msra.mxu0 %v92
      %105 = vmatprep.subr.mxu0 0.0
      %106 = vmatpush1.msra.mxu0 %v91
      %107 = vmatprep.subr.mxu0 0.0
      %108 = vmatpush1.msra.mxu0 %v90
      %109 = vmatprep.subr.mxu0 0.0
      %110 = vmatpush1.msra.mxu0 %v89
      %111 = vmatprep.subr.mxu0 0.0
      %112 = vmatpush1.msra.mxu0 %v88
      %113 = vmatprep.subr.mxu0 0.0
      %114 = vmatpush1.msra.mxu0 %v87
      %115 = vmatprep.subr.mxu0 0.0
      %116 = vmatpush1.msra.mxu0 %v86
      %117 = vmatprep.subr.mxu0 0.0
      %118 = vmatpush1.msra.mxu0 %v85
      %119 = vmatprep.subr.mxu0 0.0
      %120 = vmatpush1.msra.mxu0 %v84
      %121 = vmatprep.subr.mxu0 0.0
      %122 = vmatpush1.msra.mxu0 %v83
      %123 = vmatprep.subr.mxu0 0.0
      %124 = vmatpush1.msra.mxu0 %v82
      %125 = vmatprep.subr.mxu0 0.0
      %126 = vmatpush1.msra.mxu0 %v81
      %127 = vmatprep.subr.mxu0 0.0
      %128 = vmatpush1.msra.mxu0 %v80
      %129 = vmatprep.subr.mxu0 0.0
      %130 = vmatpush1.msra.mxu0 %v79
      %131 = vmatprep.subr.mxu0 0.0
      %132 = vmatpush1.msra.mxu0 %v78
      %133 = vmatprep.subr.mxu0 0.0
      %134 = vmatpush2.msra.mxu0 0.0
      %135 = vmatprep.subr.mxu0 0.0
      %136 = vmatpush2.msra.mxu0 0.0
      %137 = vmatprep.subr.mxu0 0.0
      %138 = vmatpush2.msra.mxu0 0.0
      %139 = vmatprep.subr.mxu0 0.0
      %140 = vmatpush2.msra.mxu0 0.0
      %141 = vmatprep.subr.mxu0 0.0
      %142 = vmatpush2.msra.mxu0 0.0
      %143 = vmatprep.subr.mxu0 0.0
      %144 = vmatpush2.msra.mxu0 0.0
      %145 = vmatprep.subr.mxu0 0.0
      %146 = vmatpush2.msra.mxu0 0.0
      %147 = vmatprep.subr.mxu0 0.0
      %148 = vmatpush2.msra.mxu0 0.0
      %149 = vmatprep.subr.mxu0 0.0
      %150 = vmatpush2.msra.mxu0 0.0
      %151 = vmatprep.subr.mxu0 0.0
      %152 = vmatpush2.msra.mxu0 0.0
      %153 = vmatprep.subr.mxu0 0.0
      %154 = vmatpush2.msra.mxu0 0.0
      %155 = vmatprep.subr.mxu0 0.0
      %156 = vmatpush2.msra.mxu0 0.0
      %157 = vmatprep.subr.mxu0 0.0
      %158 = vmatpush2.msra.mxu0 0.0
      %159 = vmatprep.subr.mxu0 0.0
      %160 = vmatpush2.msra.mxu0 0.0
      %161 = vmatprep.subr.mxu0 0.0
      %162 = vmatpush2.msra.mxu0 0.0
      %163 = vmatprep.subr.mxu0 0.0
      %164 = vmatpush2.msra.mxu0 0.0
      %165 = vmatprep.mubr.f32.mxu0 0.0
      %166 = vmatmul.mubr.f32.gmra.mxu0 %v77
      %v167 = vpop.f32.mrf.mxu0
      %v168 = vadd.f32 %v99, %v167
      %v169 = vpop.f32.mrf.mxu0
      %170 = vdwg.mxu0
      %v171 = vmax.f32 %v168, 0.0
      %172 = vst [vmem:[#allocation8] sm:$0x3] %v171
    $region29: #{tpu_custom_call.1} parent=1 // pred_fallthru
      _
    // Predicated region
    $region30: #{tpu_custom_call.1} parent=1 // pred_check
      _
    $region31: #{tpu_custom_call.1} parent=1 // pred_check_branch
      %174 = sbr.rel (0) target = $region33
    $region32: #{tpu_custom_call.1} parent=1 // pred_region
      %s176 = ssub.s32 32, 32
      %177 = vsyncadd [#allocation5], %s176
      %s179 = sshll.u32 [#allocation8], 4
      %s180 = int_to_ptr.vmem [resolvable:$true] %s179
      %182 = dma.vmem_to_hbm [thread:$0]  %s180, 32, %s3, [#allocation5]
    $region33: #{tpu_custom_call.1} parent=1 // pred_fallthru
      _
    // Predicated region
    $region34: #{tpu_custom_call.1} parent=1 // pred_check
      _
    $region35: #{tpu_custom_call.1} parent=1 // pred_check_branch
      %184 = sbr.rel (0) target = $region37
    $region36: #{tpu_custom_call.1} parent=1 // pred_region
      %185 = dma.done [#allocation5], 32
    $region37: #{tpu_custom_call.1} parent=1 // pred_fallthru
      _
    %186 = vsyncpa [#allocation4], 1
    %187 = vsyncpa [#allocation7], 1
    %188 = vsyncpa [#allocation5], 1

// kernel: tpu_custom_call.1
$region0: #{tpu_custom_call.1}
  #allocation0 [shape = 'u32[]', space=smem, size = 0x4, offset = 0x4, fixed_abs, tag = 'smem constant byte address 0x4 - core index']
  #allocation1 [shape = 'u32[144,128]{1,0:T(1,128)}', space=vmem, size = 0x12000, scoped, tag = 'internal scratch']
  #allocation2 [shape = 'f32[2,128]{1,0:T(2,128)}', space=vmem, size = 0x400, scoped, tag = 'scratch operand']
  %s0 = inlined_call_operand.hbm [shape: f32[2,2,128], index: 0, kind: input, shape index: {}]
  %s1 = inlined_call_operand.hbm [shape: f32[128,128], index: 1, kind: input, shape index: {}]
  %s2 = inlined_call_operand.vmem [shape: f32[1,128], index: 2, kind: input, shape index: {}]
  %s3 = inlined_call_operand.hbm [shape: f32[2,128], index: 3, kind: output, shape index: {}]
  %s4 = sld [smem:[#allocation0]]
  $region38: #{tpu_custom_call.1} parent=0
    _
  %s6 = ssub.s32 1, %s4
  %s7 = scalar_select 0, %s6, %s4
  $region1: #{tpu_custom_call.1} parent=0
    #allocation3 [shape = 'u8[2048]{0}', space=vmem, size = 0x800, scoped, tag = 'input window, operand 0, single buffered']
    #allocation4 [shape = 's32[1]{0}', space=sflag, size = 0x4, scoped, tag = 'scoped memory for tpu_custom_call.1']
    #allocation5 [shape = 's32[1]{0}', space=sflag, size = 0x4, scoped, tag = 'scoped memory for tpu_custom_call.1']
    #allocation6 [shape = 'u8[65536]{0}', space=vmem, size = 0x10000, scoped, tag = 'input window, operand 1, single buffered']
    #allocation7 [shape = 's32[1]{0}', space=sflag, size = 0x4, scoped, tag = 'scoped memory for tpu_custom_call.1']
    #allocation8 [shape = 'u8[1024]{0}', space=vmem, size = 0x400, scoped, tag = 'output window, operand 0, single buffered']
    %8 = vsyncpa [#allocation4], 0
    %9 = vsyncpa [#allocation7], 0
    %10 = vsyncpa [#allocation5], 0
    // Predicated region
    $region2: #{tpu_custom_call.1} parent=1 // pred_check
      _
    $region3: #{tpu_custom_call.1} parent=1 // pred_check_branch
      %12 = sbr.rel (0) target = $region5
    $region4: #{tpu_custom_call.1} parent=1 // pred_region
      %s14 = ssub.s32 64, 64
      %15 = vsyncadd [#allocation4], %s14
      %s16 = sshll.u32 [#allocation3], 4
      %s17 = int_to_ptr.vmem [resolvable:$true] %s16
      %22 = dma.hbm_to_vmem [thread:$0]  %s0, 64, %s17, [#allocation4], 32, 32, 2
    $region5: #{tpu_custom_call.1} parent=1 // pred_fallthru
      _
    // Predicated region
    $region6: #{tpu_custom_call.1} parent=1 // pred_check
      _
    $region7: #{tpu_custom_call.1} parent=1 // pred_check_branch
      %24 = sbr.rel (0) target = $region9
    $region8: #{tpu_custom_call.1} parent=1 // pred_region
      %s26 = ssub.s32 2048, 2048
      %27 = vsyncadd [#allocation7], %s26
      %s28 = sshll.u32 [#allocation6], 4
      %s29 = int_to_ptr.vmem [resolvable:$true] %s28
      %34 = dma.hbm_to_vmem [thread:$0]  %s1, 2048, %s29, [#allocation7], 128, 128, 8
    $region9: #{tpu_custom_call.1} parent=1 // pred_fallthru
      _
    // Predicated region
    $region10: #{tpu_custom_call.1} parent=1 // pred_check
      _
    $region11: #{tpu_custom_call.1} parent=1 // pred_check_branch
      %36 = sbr.rel (0) target = $region13
    $region12: #{tpu_custom_call.1} parent=1 // pred_region
      _
    $region13: #{tpu_custom_call.1} parent=1 // pred_fallthru
      _
    // Predicated region
    $region14: #{tpu_custom_call.1} parent=1 // pred_check
      _
    $region15: #{tpu_custom_call.1} parent=1 // pred_check_branch
      %38 = sbr.rel (0) target = $region17
    $region16: #{tpu_custom_call.1} parent=1 // pred_region
      %39 = dma.done [#allocation4], 64
    $region17: #{tpu_custom_call.1} parent=1 // pred_fallthru
      _
    // Predicated region
    $region18: #{tpu_custom_call.1} parent=1 // pred_check
      _
    $region19: #{tpu_custom_call.1} parent=1 // pred_check_branch
      %41 = sbr.rel (0) target = $region21
    $region20: #{tpu_custom_call.1} parent=1 // pred_region
      %42 = dma.done [#allocation7], 2048
    $region21: #{tpu_custom_call.1} parent=1 // pred_fallthru
      _
    %p43 = scmp.eq.s32.totalorder 0, 0
    // Predicated region
    $region22: #{tpu_custom_call.1} parent=1 // pred_check
      %p44 = pneg %p43
    $region23: #{tpu_custom_call.1} parent=1 // pred_check_branch
      %46 = sbr.rel (%p44) target = $region25
    $region24: #{tpu_custom_call.1} parent=1 // pred_region
      %47 = vst [vmem:[#allocation2] sm:$0x3] 0.0
    $region25: #{tpu_custom_call.1} parent=1 // pred_fallthru
      _
    %v48 = vld [vmem:[#allocation2] sm:$0x3]
    %v49 = vld [vmem:[#allocation3] sm:$0x3]
    %v50 = vld [vmem:[#allocation3 + $0x2] sm:$0x3]
    %vm51 = vcmask 1041408
    %v52 = vsel %vm51, %v49, 0.0
    %v53 = vrot.slane %v52, 4
    %v54 = vadd.f32 %v52, %v53
    %v55 = vrot.slane %v54, 2
    %v56 = vadd.f32 %v54, %v55
    %v57 = vrot.slane %v56, 1
    %v58 = vadd.f32 %v56, %v57
    %v59 = vsel %vm51, %v50, 0.0
    %v60 = vrot.slane %v59, 4
    %v61 = vadd.f32 %v59, %v60
    %v62 = vrot.slane %v61, 2
    %v63 = vadd.f32 %v61, %v62
    %v64 = vrot.slane %v63, 1
    %v65 = vadd.f32 %v63, %v64
    %vm68 = vcmask 1041409
    %v69 = vsel %vm68, %v65, %v58
    %v71 = vadd.f32 %v48, %v69
    %72 = vst [vmem:[#allocation2] sm:$0x3] %v71
    // Predicated region
    $region26: #{tpu_custom_call.1} parent=1 // pred_check
      %p73 = pneg %p43
    $region27: #{tpu_custom_call.1} parent=1 // pred_check_branch
      %75 = sbr.rel (%p73) target = $region29
    $region28: #{tpu_custom_call.1} parent=1 // pred_region
      %v76 = vld [vmem:[#allocation2] sm:$0x3]
      %v77 = vmul.f32 %v76, 0.125
      %v78 = vld [vmem:[#allocation6] sm:$0xff]
      %v79 = vld [vmem:[#allocation6 + $0x8] sm:$0xff]
      %v80 = vld [vmem:[#allocation6 + $0x10] sm:$0xff]
      %v81 = vld [vmem:[#allocation6 + $0x18] sm:$0xff]
      %v82 = vld [vmem:[#allocation6 + $0x20] sm:$0xff]
      %v83 = vld [vmem:[#allocation6 + $0x28] sm:$0xff]
      %v84 = vld [vmem:[#allocation6 + $0x30] sm:$0xff]
      %v85 = vld [vmem:[#allocation6 + $0x38] sm:$0xff]
      %v86 = vld [vmem:[#allocation6 + $0x40] sm:$0xff]
      %v87 = vld [vmem:[#allocation6 + $0x48] sm:$0xff]
      %v88 = vld [vmem:[#allocation6 + $0x50] sm:$0xff]
      %v89 = vld [vmem:[#allocation6 + $0x58] sm:$0xff]
      %v90 = vld [vmem:[#allocation6 + $0x60] sm:$0xff]
      %v91 = vld [vmem:[#allocation6 + $0x68] sm:$0xff]
      %v92 = vld [vmem:[#allocation6 + $0x70] sm:$0xff]
      %v93 = vld [vmem:[#allocation6 + $0x78] sm:$0xff]
      %v94 = vld [vmem:[%s2] sm:$0x1]
      %v96 = vlaneseq
      %v97 = vshrl.u32 %v96, 7
      %v98 = vsub.s32 0, %v97
      %v99 = vrot.slane %v94, %v98
      %101 = vmatprep.subr.mxu0 0.0
      %102 = vmatpush1.msra.mxu0 %v93
      %103 = vmatprep.subr.mxu0 0.0
      %104 = vmatpush1.msra.mxu0 %v92
      %105 = vmatprep.subr.mxu0 0.0
      %106 = vmatpush1.msra.mxu0 %v91
      %107 = vmatprep.subr.mxu0 0.0
      %108 = vmatpush1.msra.mxu0 %v90
      %109 = vmatprep.subr.mxu0 0.0
      %110 = vmatpush1.msra.mxu0 %v89
      %111 = vmatprep.subr.mxu0 0.0
      %112 = vmatpush1.msra.mxu0 %v88
      %113 = vmatprep.subr.mxu0 0.0
      %114 = vmatpush1.msra.mxu0 %v87
      %115 = vmatprep.subr.mxu0 0.0
      %116 = vmatpush1.msra.mxu0 %v86
      %117 = vmatprep.subr.mxu0 0.0
      %118 = vmatpush1.msra.mxu0 %v85
      %119 = vmatprep.subr.mxu0 0.0
      %120 = vmatpush1.msra.mxu0 %v84
      %121 = vmatprep.subr.mxu0 0.0
      %122 = vmatpush1.msra.mxu0 %v83
      %123 = vmatprep.subr.mxu0 0.0
      %124 = vmatpush1.msra.mxu0 %v82
      %125 = vmatprep.subr.mxu0 0.0
      %126 = vmatpush1.msra.mxu0 %v81
      %127 = vmatprep.subr.mxu0 0.0
      %128 = vmatpush1.msra.mxu0 %v80
      %129 = vmatprep.subr.mxu0 0.0
      %130 = vmatpush1.msra.mxu0 %v79
      %131 = vmatprep.subr.mxu0 0.0
      %132 = vmatpush1.msra.mxu0 %v78
      %133 = vmatprep.subr.mxu0 0.0
      %134 = vmatpush2.msra.mxu0 0.0
      %135 = vmatprep.subr.mxu0 0.0
      %136 = vmatpush2.msra.mxu0 0.0
      %137 = vmatprep.subr.mxu0 0.0
      %138 = vmatpush2.msra.mxu0 0.0
      %139 = vmatprep.subr.mxu0 0.0
      %140 = vmatpush2.msra.mxu0 0.0
      %141 = vmatprep.subr.mxu0 0.0
      %142 = vmatpush2.msra.mxu0 0.0
      %143 = vmatprep.subr.mxu0 0.0
      %144 = vmatpush2.msra.mxu0 0.0
      %145 = vmatprep.subr.mxu0 0.0
      %146 = vmatpush2.msra.mxu0 0.0
      %147 = vmatprep.subr.mxu0 0.0
      %148 = vmatpush2.msra.mxu0 0.0
      %149 = vmatprep.subr.mxu0 0.0
      %150 = vmatpush2.msra.mxu0 0.0
      %151 = vmatprep.subr.mxu0 0.0
      %152 = vmatpush2.msra.mxu0 0.0
      %153 = vmatprep.subr.mxu0 0.0
      %154 = vmatpush2.msra.mxu0 0.0
      %155 = vmatprep.subr.mxu0 0.0
      %156 = vmatpush2.msra.mxu0 0.0
      %157 = vmatprep.subr.mxu0 0.0
      %158 = vmatpush2.msra.mxu0 0.0
      %159 = vmatprep.subr.mxu0 0.0
      %160 = vmatpush2.msra.mxu0 0.0
      %161 = vmatprep.subr.mxu0 0.0
      %162 = vmatpush2.msra.mxu0 0.0
      %163 = vmatprep.subr.mxu0 0.0
      %164 = vmatpush2.msra.mxu0 0.0
      %165 = vmatprep.mubr.f32.mxu0 0.0
      %166 = vmatmul.mubr.f32.gmra.mxu0 %v77
      %v167 = vpop.f32.mrf.mxu0
      %v168 = vadd.f32 %v99, %v167
      %v169 = vpop.f32.mrf.mxu0
      %170 = vdwg.mxu0
      %v171 = vmax.f32 %v168, 0.0
      %172 = vst [vmem:[#allocation8] sm:$0x3] %v171
    $region29: #{tpu_custom_call.1} parent=1 // pred_fallthru
      _
    // Predicated region
    $region30: #{tpu_custom_call.1} parent=1 // pred_check
      _
    $region31: #{tpu_custom_call.1} parent=1 // pred_check_branch
      %174 = sbr.rel (0) target = $region33
    $region32: #{tpu_custom_call.1} parent=1 // pred_region
      %s176 = ssub.s32 32, 32
      %177 = vsyncadd [#allocation5], %s176
      %s179 = sshll.u32 [#allocation8], 4
      %s180 = int_to_ptr.vmem [resolvable:$true] %s179
      %182 = dma.vmem_to_hbm [thread:$0]  %s180, 32, %s3, [#allocation5]
    $region33: #{tpu_custom_call.1} parent=1 // pred_fallthru
      _
    // Predicated region
    $region34: #{tpu_custom_call.1} parent=1 // pred_check
      _
    $region35: #{tpu_custom_call.1} parent=1 // pred_check_branch
      %184 = sbr.rel (0) target = $region37
    $region36: #{tpu_custom_call.1} parent=1 // pred_region
      %185 = dma.done [#allocation5], 32
    $region37: #{tpu_custom_call.1} parent=1 // pred_fallthru
      _
    %186 = vsyncpa [#allocation4], 1
    %187 = vsyncpa [#allocation7], 1
    %188 = vsyncpa [#allocation5], 1

</llo_original>
